<compile_context>
chip_gen: v6e
topology: v6e:2x2x1
jax: 0.10.0
libtpu: 0.0.40
codegen_flags: <defaults>
</compile_context>

<pallas_src>
import functools

import jax
import jax.numpy as jnp
from jax import lax
from jax.experimental import pallas as pl
from jax.experimental.pallas import tpu as pltpu


def _round_up(v, m):
    return (v + m - 1) // m * m


def _log_sigmoid(v):
    # numerically stable log(sigmoid(v)) = min(v, 0) - log1p(exp(-|v|))
    return jnp.minimum(v, 0.0) - jnp.log1p(jnp.exp(-jnp.abs(v)))


def _chip_config():
    """(num_cores, default_tile_m, vmem_capacity_bytes) for the local chip."""
    try:
        kind = jax.devices()[0].device_kind.lower()
    except Exception:  # pragma: no cover - defensive
        kind = ""
    is_v7 = ("v7" in kind) or kind.endswith("7x")
    if is_v7:
        return 2, 512, 64 * 1024 * 1024     # 64 MiB VMEM per TensorCore
    return 1, 1024, 128 * 1024 * 1024        # single TC, 128 MiB VMEM


def _vmem_bytes(tm, D, L, Hp):
    """Rough VMEM footprint (bytes) for one core chunk at tile size tm."""
    bf2, f4, lane = 2, 4, 128

    def pad_lane(n):
        return _round_up(max(n, 1), lane)

    weights = (_round_up(D, 16) * Hp * bf2            # w1t
               + _round_up(L + D, 16) * Hp * bf2      # w1xb
               + Hp * Hp * bf2                        # w2
               + 3 * 8 * Hp * f4                      # b1, b2, w3
               + 8 * lane * f4)                       # b3
    weights *= 2                                      # default double-buffering
    streams = 2 * tm * (3 * pad_lane(D) + pad_lane(L + D)) * bf2
    inter = tm * Hp * (f4 + 2 * f4 + 2 * f4 + 2 * bf2 + 2 * f4 + 2 * f4)
    scratch = tm * lane * f4 + 2 * 8 * lane * f4
    return weights + streams + inter + scratch + (2 << 20)


def _amnre_kernel(theta_ref, thetap_ref, xb_ref, b_ref,
                  w1t_ref, w1xb_ref, b1_ref, w2_ref, b2_ref, w3_ref, b3_ref,
                  out_ref, acc_ref,
                  *, n_rows, tile_m, tiles_per_core, has_padding):
    c = pl.program_id(0)            # core chunk ("parallel")
    i = pl.program_id(1)            # batch tile within chunk ("arbitrary")
    n_inner = pl.num_programs(1)

    @pl.when(i == 0)
    def _init():
        acc_ref[...] = jnp.zeros_like(acc_ref)

    bmask = b_ref[...]                                    # (TM, D) bf16 in {0,1}

    # ---- layer 1: single stacked pos/neg dot + single fused [x|b] dot ------
    tb = jnp.concatenate([theta_ref[...] * bmask,
                          thetap_ref[...] * bmask], axis=0)      # (2TM, D) bf16
    h1_theta = jnp.dot(tb, w1t_ref[...],
                       preferred_element_type=jnp.float32)        # (2TM, Hp)
    common = (jnp.dot(xb_ref[...], w1xb_ref[...],
                      preferred_element_type=jnp.float32)
              + b1_ref[...])                                      # (TM, Hp)
    common2 = jnp.concatenate([common, common], axis=0)           # (2TM, Hp)
    h1 = jnp.maximum(h1_theta + common2, 0.0).astype(jnp.bfloat16)

    # ---- layer 2: single stacked dot ---------------------------------------
    h2 = jnp.maximum(
        jnp.dot(h1, w2_ref[...], preferred_element_type=jnp.float32)
        + b2_ref[...], 0.0)                                       # (2TM, Hp) f32

    # ---- output projection Hp -> 1 on the VPU + lane reduce ----------------
    logit = (jnp.sum(h2 * w3_ref[...], axis=-1, keepdims=True)
             + b3_ref[...])                                       # (2TM, 1)
    logit_pos = logit[:tile_m]
    logit_neg = logit[tile_m:]
    per_row = -(_log_sigmoid(logit_pos) + _log_sigmoid(-logit_neg))  # (TM, 1)

    row0 = (c * tiles_per_core + i) * tile_m
    if has_padding:
        @pl.when(row0 + tile_m <= n_rows)
        def _acc_full():
            acc_ref[...] = acc_ref[...] + per_row

        @pl.when(row0 + tile_m > n_rows)
        def _acc_masked():
            rows = row0 + lax.broadcasted_iota(jnp.int32, (tile_m, 1), 0)
            acc_ref[...] = acc_ref[...] + jnp.where(rows < n_rows, per_row, 0.0)
    else:
        acc_ref[...] = acc_ref[...] + per_row

    @pl.when(i == n_inner - 1)
    def _finalize():
        # Cross-sublane reduce only once per core chunk; lane-dense writeback.
        out_ref[...] = jnp.broadcast_to(jnp.sum(acc_ref[...]), out_ref.shape)


def amnre_loss(theta, x, b, params, *, tile_m=None, num_cores=None):
    """Scalar AMNRE loss. theta: (N, D), x: (N, L), b: (N, D) bool."""
    w1, b1, w2, b2, w3, b3 = params
    N, D = theta.shape
    L = x.shape[1]
    H = w2.shape[0]
    Hp = _round_up(H, 128)
    bf16 = jnp.bfloat16

    auto_nc, auto_tm, vmem_cap = _chip_config()
    NC = auto_nc if num_cores is None else num_cores
    NC = max(1, min(NC, max(1, N // 8)))      # never give a core only padding

    rows_per_core = -(-N // NC)
    TM = min(auto_tm if tile_m is None else tile_m, _round_up(rows_per_core, 8))
    TM = max(8, _round_up(TM, 8))
    budget = int(0.8 * vmem_cap)
    while TM > 8 and _vmem_bytes(TM, D, L, Hp) > budget:
        TM = max(8, _round_up(TM // 2, 8))
    vmem_limit = int(min(vmem_cap * 0.9,
                         max(32 * 1024 * 1024, 1.5 * _vmem_bytes(TM, D, L, Hp))))

    T = max(-(-N // (NC * TM)), 1)            # tiles per core chunk
    Np = NC * TM * T                          # padded batch rows
    has_padding = (Np != N)

    # ---- batch inputs (roll BEFORE padding) ---------------------------------
    theta_f = theta.astype(jnp.float32)
    theta_prime = jnp.roll(theta_f, 1, axis=0)
    bmask_f = b.astype(jnp.float32)
    xb_f = jnp.concatenate([x.astype(jnp.float32), bmask_f], axis=-1)  # (N, L+D)

    def pad_rows(a):
        return jnp.pad(a, ((0, Np - N), (0, 0)))

    theta_in = pad_rows(theta_f).astype(bf16)
    thetap_in = pad_rows(theta_prime).astype(bf16)
    xb_in = pad_rows(xb_f).astype(bf16)
    b_in = pad_rows(bmask_f).astype(bf16)

    # ---- weight prep: split W1 over [theta*b | x | 2b-1], fold the sign group
    w1 = w1.astype(jnp.float32)
    pad_h = ((0, 0), (0, Hp - H))
    w1t = jnp.pad(w1[:D], pad_h).astype(bf16)                        # (D, Hp)
    w1x = w1[D:D + L]                                                # (L, H)
    w1s = w1[D + L:]                                                 # (D, H)
    # (2b-1) @ W1s == b @ (2*W1s) - sum_rows(W1s): stack [W1x; 2*W1s], fold the
    # correction (computed from the bf16-rounded W1s) into b1.
    w1xb = jnp.pad(jnp.concatenate([w1x, 2.0 * w1s], axis=0),
                   pad_h).astype(bf16)                               # (L+D, Hp)
    w1s_corr = jnp.sum(w1s.astype(bf16).astype(jnp.float32), axis=0,
                       keepdims=True)                                # (1, H)
    b1p = jnp.pad(b1.reshape(1, H).astype(jnp.float32) - w1s_corr, pad_h)
    w2p = jnp.pad(w2.astype(jnp.float32),
                  ((0, Hp - H), (0, Hp - H))).astype(bf16)           # (Hp, Hp)
    b2p = jnp.pad(b2.reshape(1, H).astype(jnp.float32), pad_h)       # (1, Hp)
    w3p = jnp.pad(w3.reshape(1, H).astype(jnp.float32), pad_h)       # (1, Hp)
    b3p = b3.reshape(1, 1).astype(jnp.float32)                       # (1, 1)

    kernel = functools.partial(_amnre_kernel, n_rows=N, tile_m=TM,
                               tiles_per_core=T, has_padding=has_padding)

    batch_d = pl.BlockSpec((TM, D), lambda c, i: (c * T + i, 0))
    batch_xb = pl.BlockSpec((TM, L + D), lambda c, i: (c * T + i, 0))
    const = lambda c, i: (0, 0)

    partials = pl.pallas_call(
        kernel,
        out_shape=jax.ShapeDtypeStruct((NC * 8, 128), jnp.float32),
        grid_spec=pltpu.PrefetchScalarGridSpec(
            num_scalar_prefetch=0,
            grid=(NC, T),
            in_specs=[
                batch_d,                            # theta tile
                batch_d,                            # theta_prime tile
                batch_xb,                           # [x | b] tile
                batch_d,                            # mask tile
                pl.BlockSpec((D, Hp), const),       # W1_theta (resident)
                pl.BlockSpec((L + D, Hp), const),   # [W1_x; 2*W1_sign] (resident)
                pl.BlockSpec((1, Hp), const),       # b1 (sign-folded)
                pl.BlockSpec((Hp, Hp), const),      # W2 (resident)
                pl.BlockSpec((1, Hp), const),       # b2
                pl.BlockSpec((1, Hp), const),       # w3 row
                pl.BlockSpec((1, 1), const),        # b3
            ],
            out_specs=pl.BlockSpec((8, 128), lambda c, i: (c, 0)),
            scratch_shapes=[pltpu.VMEM((TM, 1), jnp.float32)],
        ),
        compiler_params=pltpu.CompilerParams(
            dimension_semantics=("parallel", "arbitrary"),
            vmem_limit_bytes=vmem_limit,
        ),
    )(theta_in, thetap_in, xb_in, b_in,
      w1t, w1xb, b1p, w2p, b2p, w3p, b3p)

    return jnp.sum(partials[::8, 0]) / jnp.float32(N)


def _ref_loss(theta, x, b, params, *, use_bf16):
    """Pure-JAX reference of the same forward pass (for correctness check)."""
    w1, b1, w2, b2, w3, b3 = params
    bf = b.astype(jnp.float32)
    if use_bf16:
        theta = theta.astype(jnp.bfloat16).astype(jnp.float32)
        x = x.astype(jnp.bfloat16).astype(jnp.float32)
    theta_prime = jnp.roll(theta, 1, axis=0)

    def mlp(z):
        if use_bf16:
            h = jnp.dot(z.astype(jnp.bfloat16), w1.astype(jnp.bfloat16),
                        preferred_element_type=jnp.float32) + b1
            h = jnp.maximum(h, 0.0)
            h = jnp.dot(h.astype(jnp.bfloat16), w2.astype(jnp.bfloat16),
                        preferred_element_type=jnp.float32) + b2
            h = jnp.maximum(h, 0.0)
        else:
            h = jnp.maximum(z @ w1 + b1, 0.0)
            h = jnp.maximum(h @ w2 + b2, 0.0)
        return (h @ w3 + b3)[..., 0]

    zp = jnp.concatenate([theta * bf, x, 2.0 * bf - 1.0], axis=-1)
    zn = jnp.concatenate([theta_prime * bf, x, 2.0 * bf - 1.0], axis=-1)
    log_r, log_r_prime = mlp(zp), mlp(zn)
    l1 = -jnp.mean(jax.nn.log_sigmoid(log_r))
    l0 = -jnp.mean(jax.nn.log_sigmoid(-log_r_prime))
    return l1 + l0


if __name__ == "__main__":
    key = jax.random.PRNGKey(0)
    N, D, L, H = 8, 4, 8, 32          # batch, theta dim, x dim, MLP hidden width
    F = 2 * D + L                      # AMNRE classifier input: [theta*b, x, 2b-1]

    ks = jax.random.split(key, 6)
    theta = jax.random.normal(ks[0], (N, D), jnp.float32)
    x = jax.random.normal(ks[1], (N, L), jnp.float32)
    b = jax.random.bernoulli(ks[2], 0.5, (N, D))          # mask_dist.sample(theta.shape[:-1])

    # Deterministic synthetic estimator parameters (AMNRE MLP: F -> H -> H -> 1).
    # TODO(synk): estimator/mask_dist are user-supplied modules in lampe; fixed here
    # to a 2-hidden-layer ReLU MLP classifier + Bernoulli(0.5) mask sampled host-side.
    w1 = jax.random.normal(ks[3], (F, H), jnp.float32) / jnp.sqrt(jnp.float32(F))
    b1 = jnp.zeros((1, H), jnp.float32)
    w2 = jax.random.normal(ks[4], (H, H), jnp.float32) / jnp.sqrt(jnp.float32(H))
    b2 = jnp.zeros((1, H), jnp.float32)
    w3 = jax.random.normal(ks[5], (H, 1), jnp.float32) / jnp.sqrt(jnp.float32(H))
    b3 = jnp.zeros((1, 1), jnp.float32)
    params = (w1, b1, w2, b2, w3, b3)

    loss = jax.block_until_ready(amnre_loss(theta, x, b, params))

    ref_bf16 = jax.block_until_ready(_ref_loss(theta, x, b, params, use_bf16=True))
    ref_f32 = jax.block_until_ready(_ref_loss(theta, x, b, params, use_bf16=False))

    assert jnp.isfinite(loss), "kernel produced non-finite loss"
    assert jnp.allclose(loss, ref_bf16, rtol=1e-2, atol=1e-3), (loss, ref_bf16)
    assert jnp.allclose(loss, ref_f32, rtol=5e-2, atol=5e-2), (loss, ref_f32)

    print("KERNEL_OK")
</pallas_src>

<mosaic_0001>
module attributes {stable_mosaic.version = 11 : i64} {
  func.func @_amnre_kernel(%arg0: i32, %arg1: i32, %arg2: memref<8x4xbf16, #tpu.memory_space<vmem>>, %arg3: memref<8x4xbf16, #tpu.memory_space<vmem>>, %arg4: memref<8x12xbf16, #tpu.memory_space<vmem>>, %arg5: memref<8x4xbf16, #tpu.memory_space<vmem>>, %arg6: memref<4x128xbf16, #tpu.memory_space<vmem>>, %arg7: memref<12x128xbf16, #tpu.memory_space<vmem>>, %arg8: memref<1x128xf32, #tpu.memory_space<vmem>>, %arg9: memref<128x128xbf16, #tpu.memory_space<vmem>>, %arg10: memref<1x128xf32, #tpu.memory_space<vmem>>, %arg11: memref<1x128xf32, #tpu.memory_space<vmem>>, %arg12: memref<1x1xf32, #tpu.memory_space<vmem>>, %arg13: memref<8x128xf32, #tpu.memory_space<vmem>>, %arg14: memref<8x1xf32, #tpu.memory_space<vmem>>) attributes {dimension_semantics = [#tpu.dimension_semantics<parallel>, #tpu.dimension_semantics<arbitrary>], iteration_bounds = array<i64: 1, 1>, scalar_prefetch = 0 : i64, scratch_operands = 1 : i64, tpu.core_type = #tpu.core_type<tc>, window_params = [{transform_indices = @transform_0, window_bounds = array<i64: 8, 4>}, {transform_indices = @transform_1, window_bounds = array<i64: 8, 4>}, {transform_indices = @transform_2, window_bounds = array<i64: 8, 12>}, {transform_indices = @transform_3, window_bounds = array<i64: 8, 4>}, {pipeline_mode = #tpu.pipeline_mode<synchronous>, transform_indices = @transform_4, window_bounds = array<i64: 4, 128>}, {pipeline_mode = #tpu.pipeline_mode<synchronous>, transform_indices = @transform_5, window_bounds = array<i64: 12, 128>}, {pipeline_mode = #tpu.pipeline_mode<synchronous>, transform_indices = @transform_6, window_bounds = array<i64: 1, 128>}, {pipeline_mode = #tpu.pipeline_mode<synchronous>, transform_indices = @transform_7, window_bounds = array<i64: 128, 128>}, {pipeline_mode = #tpu.pipeline_mode<synchronous>, transform_indices = @transform_8, window_bounds = array<i64: 1, 128>}, {pipeline_mode = #tpu.pipeline_mode<synchronous>, transform_indices = @transform_9, window_bounds = array<i64: 1, 128>}, {pipeline_mode = #tpu.pipeline_mode<synchronous>, transform_indices = @transform_10, window_bounds = array<i64: 1, 1>}, {transform_indices = @transform_11, window_bounds = array<i64: 8, 128>}]} {
    %c0_i32 = arith.constant 0 : i32
    %0 = arith.cmpi eq, %arg1, %c0_i32 : i32
    %1 = arith.extui %0 : i1 to i32
    %c0_i32_0 = arith.constant 0 : i32
    %2 = arith.cmpi ne, %1, %c0_i32_0 : i32
    scf.if %2 {
      %cst_39 = arith.constant 0.000000e+00 : f32
      %66 = vector.broadcast %cst_39 : f32 to vector<8x1xf32>
      %c0_40 = arith.constant 0 : index
      %c0_41 = arith.constant 0 : index
      %67 = vector.load %arg14[%c0_40, %c0_41] : memref<8x1xf32, #tpu.memory_space<vmem>>, vector<8x1xf32>
      tpu.vector_store %arg14[%c0_40, %c0_41], %66 {strides = array<i32>} : memref<8x1xf32, #tpu.memory_space<vmem>>, vector<8x1xf32>,
    } else {
    }
    %c0 = arith.constant 0 : index
    %c0_1 = arith.constant 0 : index
    %3 = vector.load %arg5[%c0, %c0_1] : memref<8x4xbf16, #tpu.memory_space<vmem>>, vector<8x4xbf16>
    %c0_2 = arith.constant 0 : index
    %c0_3 = arith.constant 0 : index
    %4 = vector.load %arg2[%c0_2, %c0_3] : memref<8x4xbf16, #tpu.memory_space<vmem>>, vector<8x4xbf16>
    %5 = arith.mulf %4, %3 : vector<8x4xbf16>
    %c0_4 = arith.constant 0 : index
    %c0_5 = arith.constant 0 : index
    %6 = vector.load %arg3[%c0_4, %c0_5] : memref<8x4xbf16, #tpu.memory_space<vmem>>, vector<8x4xbf16>
    %7 = arith.mulf %6, %3 : vector<8x4xbf16>
    %8 = tpu.concatenate %5, %7 in 0 : vector<8x4xbf16>, vector<8x4xbf16> -> vector<16x4xbf16>
    %c0_6 = arith.constant 0 : index
    %c0_7 = arith.constant 0 : index
    %9 = vector.load %arg6[%c0_6, %c0_7] : memref<4x128xbf16, #tpu.memory_space<vmem>>, vector<4x128xbf16>
    %cst = arith.constant dense<0.000000e+00> : vector<16x128xf32>
    %10 = tpu.matmul %8, %9, %cst {dimension_numbers = #tpu.dot_dimension_numbers<[1], [0], [0], [1], [0, 0, 1, 1], [], []>} : vector<16x4xbf16>, vector<4x128xbf16>, vector<16x128xf32> -> vector<16x128xf32>
    %c0_8 = arith.constant 0 : index
    %c0_9 = arith.constant 0 : index
    %11 = vector.load %arg4[%c0_8, %c0_9] : memref<8x12xbf16, #tpu.memory_space<vmem>>, vector<8x12xbf16>
    %c0_10 = arith.constant 0 : index
    %c0_11 = arith.constant 0 : index
    %12 = vector.load %arg7[%c0_10, %c0_11] : memref<12x128xbf16, #tpu.memory_space<vmem>>, vector<12x128xbf16>
    %cst_12 = arith.constant dense<0.000000e+00> : vector<8x128xf32>
    %13 = tpu.matmul %11, %12, %cst_12 {dimension_numbers = #tpu.dot_dimension_numbers<[1], [0], [0], [1], [0, 0, 1, 1], [], []>} : vector<8x12xbf16>, vector<12x128xbf16>, vector<8x128xf32> -> vector<8x128xf32>
    %c0_13 = arith.constant 0 : index
    %c0_14 = arith.constant 0 : index
    %14 = vector.load %arg8[%c0_13, %c0_14] : memref<1x128xf32, #tpu.memory_space<vmem>>, vector<1x128xf32>
    %15 = vector.broadcast %14 : vector<1x128xf32> to vector<8x128xf32>
    %16 = arith.addf %13, %15 : vector<8x128xf32>
    %17 = tpu.concatenate %16, %16 in 0 : vector<8x128xf32>, vector<8x128xf32> -> vector<16x128xf32>
    %18 = arith.addf %10, %17 : vector<16x128xf32>
    %cst_15 = arith.constant 0.000000e+00 : f32
    %19 = vector.broadcast %cst_15 : f32 to vector<16x128xf32>
    %20 = arith.maximumf %18, %19 : vector<16x128xf32>
    %21 = arith.truncf %20 : vector<16x128xf32> to vector<16x128xbf16>
    %c0_16 = arith.constant 0 : index
    %c0_17 = arith.constant 0 : index
    %22 = vector.load %arg9[%c0_16, %c0_17] : memref<128x128xbf16, #tpu.memory_space<vmem>>, vector<128x128xbf16>
    %cst_18 = arith.constant dense<0.000000e+00> : vector<16x128xf32>
    %23 = tpu.matmul %21, %22, %cst_18 {dimension_numbers = #tpu.dot_dimension_numbers<[1], [0], [0], [1], [0, 0, 1, 1], [], []>} : vector<16x128xbf16>, vector<128x128xbf16>, vector<16x128xf32> -> vector<16x128xf32>
    %c0_19 = arith.constant 0 : index
    %c0_20 = arith.constant 0 : index
    %24 = vector.load %arg10[%c0_19, %c0_20] : memref<1x128xf32, #tpu.memory_space<vmem>>, vector<1x128xf32>
    %25 = vector.broadcast %24 : vector<1x128xf32> to vector<16x128xf32>
    %26 = arith.addf %23, %25 : vector<16x128xf32>
    %cst_21 = arith.constant 0.000000e+00 : f32
    %27 = vector.broadcast %cst_21 : f32 to vector<16x128xf32>
    %28 = arith.maximumf %26, %27 : vector<16x128xf32>
    %c0_22 = arith.constant 0 : index
    %c0_23 = arith.constant 0 : index
    %29 = vector.load %arg11[%c0_22, %c0_23] : memref<1x128xf32, #tpu.memory_space<vmem>>, vector<1x128xf32>
    %30 = vector.broadcast %29 : vector<1x128xf32> to vector<16x128xf32>
    %31 = arith.mulf %28, %30 : vector<16x128xf32>
    %cst_24 = arith.constant dense<0.000000e+00> : vector<16xf32>
    %32 = vector.multi_reduction <add>, %31, %cst_24 [1] : vector<16x128xf32> to vector<16xf32>
    %33 = vector.shape_cast %32 : vector<16xf32> to vector<16x1xf32>
    %c0_25 = arith.constant 0 : index
    %c0_26 = arith.constant 0 : index
    %34 = vector.load %arg12[%c0_25, %c0_26] : memref<1x1xf32, #tpu.memory_space<vmem>>, vector<1x1xf32>
    %35 = vector.broadcast %34 : vector<1x1xf32> to vector<16x1xf32>
    %36 = arith.addf %33, %35 : vector<16x1xf32>
    %37 = vector.extract_strided_slice %36 {offsets = [0, 0], sizes = [8, 1], strides = [1, 1]} : vector<16x1xf32> to vector<8x1xf32>
    %38 = vector.extract_strided_slice %36 {offsets = [8, 0], sizes = [8, 1], strides = [1, 1]} : vector<16x1xf32> to vector<8x1xf32>
    %cst_27 = arith.constant 0.000000e+00 : f32
    %39 = vector.broadcast %cst_27 : f32 to vector<8x1xf32>
    %40 = arith.minimumf %37, %39 : vector<8x1xf32>
    %41 = math.absf %37 : vector<8x1xf32>
    %cst_28 = arith.constant 0.000000e+00 : f32
    %42 = vector.broadcast %cst_28 : f32 to vector<8x1xf32>
    %43 = arith.subf %42, %41 : vector<8x1xf32>
    %44 = math.exp %43 : vector<8x1xf32>
    %45 = math.log1p %44 : vector<8x1xf32>
    %46 = arith.subf %40, %45 : vector<8x1xf32>
    %cst_29 = arith.constant 0.000000e+00 : f32
    %47 = vector.broadcast %cst_29 : f32 to vector<8x1xf32>
    %48 = arith.subf %47, %38 : vector<8x1xf32>
    %cst_30 = arith.constant 0.000000e+00 : f32
    %49 = vector.broadcast %cst_30 : f32 to vector<8x1xf32>
    %50 = arith.minimumf %48, %49 : vector<8x1xf32>
    %51 = math.absf %48 : vector<8x1xf32>
    %cst_31 = arith.constant 0.000000e+00 : f32
    %52 = vector.broadcast %cst_31 : f32 to vector<8x1xf32>
    %53 = arith.subf %52, %51 : vector<8x1xf32>
    %54 = math.exp %53 : vector<8x1xf32>
    %55 = math.log1p %54 : vector<8x1xf32>
    %56 = arith.subf %50, %55 : vector<8x1xf32>
    %57 = arith.addf %46, %56 : vector<8x1xf32>
    %cst_32 = arith.constant 0.000000e+00 : f32
    %58 = vector.broadcast %cst_32 : f32 to vector<8x1xf32>
    %59 = arith.subf %58, %57 : vector<8x1xf32>
    %c0_33 = arith.constant 0 : index
    %c0_34 = arith.constant 0 : index
    %60 = vector.load %arg14[%c0_33, %c0_34] : memref<8x1xf32, #tpu.memory_space<vmem>>, vector<8x1xf32>
    %61 = arith.addf %60, %59 : vector<8x1xf32>
    %c0_35 = arith.constant 0 : index
    %c0_36 = arith.constant 0 : index
    %62 = vector.load %arg14[%c0_35, %c0_36] : memref<8x1xf32, #tpu.memory_space<vmem>>, vector<8x1xf32>
    tpu.vector_store %arg14[%c0_35, %c0_36], %61 {strides = array<i32>} : memref<8x1xf32, #tpu.memory_space<vmem>>, vector<8x1xf32>,
    %c0_i32_37 = arith.constant 0 : i32
    %63 = arith.cmpi eq, %arg1, %c0_i32_37 : i32
    %64 = arith.extui %63 : i1 to i32
    %c0_i32_38 = arith.constant 0 : i32
    %65 = arith.cmpi ne, %64, %c0_i32_38 : i32
    scf.if %65 {
      %c0_39 = arith.constant 0 : index
      %c0_40 = arith.constant 0 : index
      %66 = vector.load %arg14[%c0_39, %c0_40] : memref<8x1xf32, #tpu.memory_space<vmem>>, vector<8x1xf32>
      %67 = vector.shape_cast %66 : vector<8x1xf32> to vector<1x8x1xf32>
      %cst_41 = arith.constant dense<0.000000e+00> : vector<1xf32>
      %68 = vector.multi_reduction <add>, %67, %cst_41 [1, 2] : vector<1x8x1xf32> to vector<1xf32>
      %69 = vector.shape_cast %68 : vector<1xf32> to vector<1x1x1xf32>
      %70 = vector.extract %69[0, 0, 0] : f32 from vector<1x1x1xf32>
      %71 = vector.broadcast %70 : f32 to vector<8x128xf32>
      %c0_42 = arith.constant 0 : index
      %c0_43 = arith.constant 0 : index
      %72 = vector.load %arg13[%c0_42, %c0_43] : memref<8x128xf32, #tpu.memory_space<vmem>>, vector<8x128xf32>
      tpu.vector_store %arg13[%c0_42, %c0_43], %71 {strides = array<i32>} : memref<8x128xf32, #tpu.memory_space<vmem>>, vector<8x128xf32>,
    } else {
    }
    return
  }
  func.func @transform_0(%arg0: i32, %arg1: i32) -> (i32, i32) {
    %c1_i32 = arith.constant 1 : i32
    %0 = arith.muli %arg0, %c1_i32 : i32
    %1 = arith.addi %0, %arg1 : i32
    %c0_i32 = arith.constant 0 : i32
    %c0_i32_0 = arith.constant 0 : i32
    return %1, %c0_i32 : i32, i32
  }
  func.func @transform_1(%arg0: i32, %arg1: i32) -> (i32, i32) {
    %c1_i32 = arith.constant 1 : i32
    %0 = arith.muli %arg0, %c1_i32 : i32
    %1 = arith.addi %0, %arg1 : i32
    %c0_i32 = arith.constant 0 : i32
    %c0_i32_0 = arith.constant 0 : i32
    return %1, %c0_i32 : i32, i32
  }
  func.func @transform_2(%arg0: i32, %arg1: i32) -> (i32, i32) {
    %c1_i32 = arith.constant 1 : i32
    %0 = arith.muli %arg0, %c1_i32 : i32
    %1 = arith.addi %0, %arg1 : i32
    %c0_i32 = arith.constant 0 : i32
    %c0_i32_0 = arith.constant 0 : i32
    return %1, %c0_i32 : i32, i32
  }
  func.func @transform_3(%arg0: i32, %arg1: i32) -> (i32, i32) {
    %c1_i32 = arith.constant 1 : i32
    %0 = arith.muli %arg0, %c1_i32 : i32
    %1 = arith.addi %0, %arg1 : i32
    %c0_i32 = arith.constant 0 : i32
    %c0_i32_0 = arith.constant 0 : i32
    return %1, %c0_i32 : i32, i32
  }
  func.func @transform_4(%arg0: i32, %arg1: i32) -> (i32, i32) {
    %c0_i32 = arith.constant 0 : i32
    %c0_i32_0 = arith.constant 0 : i32
    %c0_i32_1 = arith.constant 0 : i32
    return %c0_i32, %c0_i32_0 : i32, i32
  }
  func.func @transform_5(%arg0: i32, %arg1: i32) -> (i32, i32) {
    %c0_i32 = arith.constant 0 : i32
    %c0_i32_0 = arith.constant 0 : i32
    %c0_i32_1 = arith.constant 0 : i32
    return %c0_i32, %c0_i32_0 : i32, i32
  }
  func.func @transform_6(%arg0: i32, %arg1: i32) -> (i32, i32) {
    %c0_i32 = arith.constant 0 : i32
    %c0_i32_0 = arith.constant 0 : i32
    %c0_i32_1 = arith.constant 0 : i32
    return %c0_i32, %c0_i32_0 : i32, i32
  }
  func.func @transform_7(%arg0: i32, %arg1: i32) -> (i32, i32) {
    %c0_i32 = arith.constant 0 : i32
    %c0_i32_0 = arith.constant 0 : i32
    %c0_i32_1 = arith.constant 0 : i32
    return %c0_i32, %c0_i32_0 : i32, i32
  }
  func.func @transform_8(%arg0: i32, %arg1: i32) -> (i32, i32) {
    %c0_i32 = arith.constant 0 : i32
    %c0_i32_0 = arith.constant 0 : i32
    %c0_i32_1 = arith.constant 0 : i32
    return %c0_i32, %c0_i32_0 : i32, i32
  }
  func.func @transform_9(%arg0: i32, %arg1: i32) -> (i32, i32) {
    %c0_i32 = arith.constant 0 : i32
    %c0_i32_0 = arith.constant 0 : i32
    %c0_i32_1 = arith.constant 0 : i32
    return %c0_i32, %c0_i32_0 : i32, i32
  }
  func.func @transform_10(%arg0: i32, %arg1: i32) -> (i32, i32) {
    %c0_i32 = arith.constant 0 : i32
    %c0_i32_0 = arith.constant 0 : i32
    %c0_i32_1 = arith.constant 0 : i32
    return %c0_i32, %c0_i32_0 : i32, i32
  }
  func.func @transform_11(%arg0: i32, %arg1: i32) -> (i32, i32) {
    %c0_i32 = arith.constant 0 : i32
    %c0_i32_0 = arith.constant 0 : i32
    return %arg0, %c0_i32 : i32, i32
  }
}

</mosaic_0001>

<llo_original>
// kernel: tpu_custom_call.1
$region0: #{tpu_custom_call.1}
  #allocation0 [shape = 'u32[]', space=smem, size = 0x4, offset = 0x4, fixed_abs, tag = 'smem constant byte address 0x4 - core index']
  #allocation1 [shape = 'u32[144,128]{1,0:T(1,128)}', space=vmem, size = 0x12000, scoped, tag = 'internal scratch']
  #allocation2 [shape = 'f32[8,1]{1,0:T(8,128)}', space=vmem, size = 0x1000, scoped, tag = 'scratch operand']
  #allocation3 [shape = 'f32[1,1]{1,0:T(1,128)S(1)}', space=vmem, size = 0x200, scoped, tag = 'scoped memory for tpu_custom_call.1']
  %s0 = inlined_call_operand.vmem [shape: bf16[8,4], index: 0, kind: input, shape index: {}]
  %s1 = inlined_call_operand.vmem [shape: bf16[8,4], index: 1, kind: input, shape index: {}]
  %s2 = inlined_call_operand.vmem [shape: bf16[8,12], index: 2, kind: input, shape index: {}]
  %s3 = inlined_call_operand.vmem [shape: bf16[8,4], index: 3, kind: input, shape index: {}]
  %s4 = inlined_call_operand.vmem [shape: bf16[4,128], index: 4, kind: input, shape index: {}]
  %s5 = inlined_call_operand.vmem [shape: bf16[12,128], index: 5, kind: input, shape index: {}]
  %s6 = inlined_call_operand.vmem [shape: f32[1,128], index: 6, kind: input, shape index: {}]
  %s7 = inlined_call_operand.hbm [shape: bf16[128,128], index: 7, kind: input, shape index: {}]
  %s8 = inlined_call_operand.vmem [shape: f32[1,128], index: 8, kind: input, shape index: {}]
  %s9 = inlined_call_operand.vmem [shape: f32[1,128], index: 9, kind: input, shape index: {}]
  %s10 = inlined_call_operand.<no memory space> [shape: f32[1,1], index: 10, kind: input, shape index: {}]
  %s11 = inlined_call_operand.hbm [shape: f32[8,128], index: 11, kind: output, shape index: {}]
  %s12 = sld [smem:[#allocation0]]
  $region66: #{tpu_custom_call.1} parent=0
    _
  %s14 = ssub.s32 1, %s12
  %s15 = scalar_select 0, %s14, %s12
  %v16 = vstv %s10
  %17 = vst [vmem:[#allocation3] sm:$0x1] %v16
  $region1: #{tpu_custom_call.1} parent=0
    #allocation4 [shape = 'u8[32768]{0}', space=vmem, size = 0x8000, scoped, tag = 'input window, operand 7, single buffered']
    #allocation5 [shape = 's32[1]{0}', space=sflag, size = 0x4, scoped, tag = 'scoped memory for tpu_custom_call.1']
    #allocation6 [shape = 's32[1]{0}', space=sflag, size = 0x4, scoped, tag = 'scoped memory for tpu_custom_call.1']
    #allocation7 [shape = 'u8[4096]{0}', space=vmem, size = 0x1000, scoped, tag = 'output window, operand 0, single buffered']
    %18 = vsyncpa [#allocation5], 0
    %19 = vsyncpa [#allocation6], 0
    // Predicated region
    $region2: #{tpu_custom_call.1} parent=1 // pred_check
      _
    $region3: #{tpu_custom_call.1} parent=1 // pred_check_branch
      %21 = sbr.rel (0) target = $region5
    $region4: #{tpu_custom_call.1} parent=1 // pred_region
      %s22 = sadd.s32 0, 0
      %p23 = scmp.lt.s32.totalorder %s22, 0
      %s24 = scalar_select %p23, %s22, 0
      %s25 = smul.addr %s24, 4
      %s26 = scalar_lea.vmem %s0, %s25
      %s27 = sadd.s32 0, 0
    $region5: #{tpu_custom_call.1} parent=1 // pred_fallthru
      _
    // Predicated region
    $region6: #{tpu_custom_call.1} parent=1 // pred_check
      _
    $region7: #{tpu_custom_call.1} parent=1 // pred_check_branch
      %29 = sbr.rel (0) target = $region9
    $region8: #{tpu_custom_call.1} parent=1 // pred_region
      %s30 = sadd.s32 0, 0
      %p31 = scmp.lt.s32.totalorder %s30, 0
      %s32 = scalar_select %p31, %s30, 0
      %s33 = smul.addr %s32, 4
      %s34 = scalar_lea.vmem %s1, %s33
      %s35 = sadd.s32 0, 0
    $region9: #{tpu_custom_call.1} parent=1 // pred_fallthru
      _
    // Predicated region
    $region10: #{tpu_custom_call.1} parent=1 // pred_check
      _
    $region11: #{tpu_custom_call.1} parent=1 // pred_check_branch
      %37 = sbr.rel (0) target = $region13
    $region12: #{tpu_custom_call.1} parent=1 // pred_region
      %s38 = sadd.s32 0, 0
      %p39 = scmp.lt.s32.totalorder %s38, 0
      %s40 = scalar_select %p39, %s38, 0
      %s41 = smul.addr %s40, 4
      %s42 = scalar_lea.vmem %s2, %s41
      %s43 = sadd.s32 0, 0
    $region13: #{tpu_custom_call.1} parent=1 // pred_fallthru
      _
    // Predicated region
    $region14: #{tpu_custom_call.1} parent=1 // pred_check
      _
    $region15: #{tpu_custom_call.1} parent=1 // pred_check_branch
      %45 = sbr.rel (0) target = $region17
    $region16: #{tpu_custom_call.1} parent=1 // pred_region
      %s46 = sadd.s32 0, 0
      %p47 = scmp.lt.s32.totalorder %s46, 0
      %s48 = scalar_select %p47, %s46, 0
      %s49 = smul.addr %s48, 4
      %s50 = scalar_lea.vmem %s3, %s49
      %s51 = sadd.s32 0, 0
    $region17: #{tpu_custom_call.1} parent=1 // pred_fallthru
      _
    // Predicated region
    $region18: #{tpu_custom_call.1} parent=1 // pred_check
      _
    $region19: #{tpu_custom_call.1} parent=1 // pred_check_branch
      %53 = sbr.rel (0) target = $region21
    $region20: #{tpu_custom_call.1} parent=1 // pred_region
      _
    $region21: #{tpu_custom_call.1} parent=1 // pred_fallthru
      _
    // Predicated region
    $region22: #{tpu_custom_call.1} parent=1 // pred_check
      _
    $region23: #{tpu_custom_call.1} parent=1 // pred_check_branch
      %55 = sbr.rel (0) target = $region25
    $region24: #{tpu_custom_call.1} parent=1 // pred_region
      _
    $region25: #{tpu_custom_call.1} parent=1 // pred_fallthru
      _
    // Predicated region
    $region26: #{tpu_custom_call.1} parent=1 // pred_check
      _
    $region27: #{tpu_custom_call.1} parent=1 // pred_check_branch
      %57 = sbr.rel (0) target = $region29
    $region28: #{tpu_custom_call.1} parent=1 // pred_region
      _
    $region29: #{tpu_custom_call.1} parent=1 // pred_fallthru
      _
    // Predicated region
    $region30: #{tpu_custom_call.1} parent=1 // pred_check
      _
    $region31: #{tpu_custom_call.1} parent=1 // pred_check_branch
      %59 = sbr.rel (0) target = $region33
    $region32: #{tpu_custom_call.1} parent=1 // pred_region
      %s61 = ssub.s32 1024, 1024
      %62 = vsyncadd [#allocation5], %s61
      %s63 = sshll.u32 [#allocation4], 4
      %s64 = int_to_ptr.vmem [resolvable:$true] %s63
      %69 = dma.hbm_to_vmem [thread:$0]  %s7, 1024, %s64, [#allocation5], 64, 64, 4
    $region33: #{tpu_custom_call.1} parent=1 // pred_fallthru
      _
    // Predicated region
    $region34: #{tpu_custom_call.1} parent=1 // pred_check
      _
    $region35: #{tpu_custom_call.1} parent=1 // pred_check_branch
      %71 = sbr.rel (0) target = $region37
    $region36: #{tpu_custom_call.1} parent=1 // pred_region
      _
    $region37: #{tpu_custom_call.1} parent=1 // pred_fallthru
      _
    // Predicated region
    $region38: #{tpu_custom_call.1} parent=1 // pred_check
      _
    $region39: #{tpu_custom_call.1} parent=1 // pred_check_branch
      %73 = sbr.rel (0) target = $region41
    $region40: #{tpu_custom_call.1} parent=1 // pred_region
      _
    $region41: #{tpu_custom_call.1} parent=1 // pred_fallthru
      _
    // Predicated region
    $region42: #{tpu_custom_call.1} parent=1 // pred_check
      _
    $region43: #{tpu_custom_call.1} parent=1 // pred_check_branch
      %75 = sbr.rel (0) target = $region45
    $region44: #{tpu_custom_call.1} parent=1 // pred_region
      _
    $region45: #{tpu_custom_call.1} parent=1 // pred_fallthru
      _
    // Predicated region
    $region46: #{tpu_custom_call.1} parent=1 // pred_check
      _
    $region47: #{tpu_custom_call.1} parent=1 // pred_check_branch
      %77 = sbr.rel (0) target = $region49
    $region48: #{tpu_custom_call.1} parent=1 // pred_region
      %78 = dma.done [#allocation5], 1024
    $region49: #{tpu_custom_call.1} parent=1 // pred_fallthru
      _
    %s79 = sadd.s32 0, 0
    %p80 = scmp.lt.s32.totalorder %s79, 0
    %s81 = scalar_select %p80, %s79, 0
    %s82 = smul.addr %s81, 4
    %s83 = scalar_lea.vmem %s0, %s82
    %s84 = sadd.s32 0, 0
    %p85 = scmp.lt.s32.totalorder %s84, 0
    %s86 = scalar_select %p85, %s84, 0
    %s87 = smul.addr %s86, 4
    %s88 = scalar_lea.vmem %s1, %s87
    %s89 = sadd.s32 0, 0
    %p90 = scmp.lt.s32.totalorder %s89, 0
    %s91 = scalar_select %p90, %s89, 0
    %s92 = smul.addr %s91, 4
    %s93 = scalar_lea.vmem %s2, %s92
    %s94 = sadd.s32 0, 0
    %p95 = scmp.lt.s32.totalorder %s94, 0
    %s96 = scalar_select %p95, %s94, 0
    %s97 = smul.addr %s96, 4
    %s98 = scalar_lea.vmem %s3, %s97
    %s99 = sadd.s32 0, 0
    %p100 = scmp.lt.s32.totalorder %s99, 0
    %s101 = scalar_select %p100, %s99, 0
    %s102 = smul.addr %s101, 4
    %s103 = scalar_lea.vmem %s0, %s102
    %s104 = sadd.s32 0, 0
    %s105 = sadd.s32 0, 0
    %p106 = scmp.lt.s32.totalorder %s105, 0
    %s107 = scalar_select %p106, %s105, 0
    %s108 = smul.addr %s107, 4
    %s109 = scalar_lea.vmem %s1, %s108
    %s110 = sadd.s32 0, 0
    %s111 = sadd.s32 0, 0
    %p112 = scmp.lt.s32.totalorder %s111, 0
    %s113 = scalar_select %p112, %s111, 0
    %s114 = smul.addr %s113, 4
    %s115 = scalar_lea.vmem %s2, %s114
    %s116 = sadd.s32 0, 0
    %s117 = sadd.s32 0, 0
    %p118 = scmp.lt.s32.totalorder %s117, 0
    %s119 = scalar_select %p118, %s117, 0
    %s120 = smul.addr %s119, 4
    %s121 = scalar_lea.vmem %s3, %s120
    %s122 = sadd.s32 0, 0
    %p124 = scmp.eq.s32.totalorder 0, 0
    // Predicated region
    $region50: #{tpu_custom_call.1} parent=1 // pred_check
      %p125 = pneg %p124
    $region51: #{tpu_custom_call.1} parent=1 // pred_check_branch
      %127 = sbr.rel (%p125) target = $region53
    $region52: #{tpu_custom_call.1} parent=1 // pred_region
      %vm128 = vcmask 7168
      %129 = vst.msk [vmem:[#allocation2] sm:$0xff] %vm128, 0.0
    $region53: #{tpu_custom_call.1} parent=1 // pred_fallthru
      _
    %v130 = vld [vmem:[%s121] sm:$0xf]
    %v131 = vld [vmem:[%s103] sm:$0xf]
    %v132 = vmul.bf16 %v131, %v130
    %v133 = vld [vmem:[%s109] sm:$0xf]
    %v134 = vmul.bf16 %v133, %v130
    %v136 = vunpack.c.l.b16 %v134
    %v137 = vpack.c.b16 %v136, %v136
    %vm138 = vcmask 1043456
    %v141 = vsel %vm138, %v132, %v137
    %v142 = vld [vmem:[%s4] sm:$0x3]
    %v143 = vld [vmem:[%s115] sm:$0xf]
    %v144 = vld [vmem:[%s5] sm:$0xf]
    %v145 = vld [vmem:[%s5 + $0x4] sm:$0x3]
    %v146 = vld [vmem:[%s6] sm:$0x1]
    %v148 = vlaneseq
    %v149 = vshrl.u32 %v148, 7
    %v150 = vsub.s32 0, %v149
    %v151 = vrot.slane %v146, %v150
    %v155 = vunpack.c.l.b16 %v144
    %v156 = vunpack.c.l.b16 %v145
    %v157 = vpack.c.b16 %v156, %v155
    %vm158 = vcmask 97280
    %v160 = vsel %vm158, %v143, 0
    %vm162 = vcmask 1045504
    %v164 = vsel %vm162, %v157, 0
    %166 = vmatprep.subr.bf16.mxu0 0
    %167 = vmatpush1.bf16.msra.mxu0 0
    %168 = vmatprep.subr.bf16.mxu0 0
    %169 = vmatpush1.bf16.msra.mxu0 0
    %170 = vmatprep.subr.bf16.mxu0 0
    %171 = vmatpush1.bf16.msra.mxu0 0
    %172 = vmatprep.subr.bf16.mxu0 0
    %173 = vmatpush1.bf16.msra.mxu0 0
    %174 = vmatprep.subr.bf16.mxu0 0
    %175 = vmatpush1.bf16.msra.mxu0 0
    %176 = vmatprep.subr.bf16.mxu0 0
    %177 = vmatpush1.bf16.msra.mxu0 0
    %178 = vmatprep.subr.bf16.mxu0 0
    %179 = vmatpush1.bf16.msra.mxu0 0
    %180 = vmatprep.subr.bf16.mxu0 0
    %181 = vmatpush1.bf16.msra.mxu0 %v164
    %182 = vmatprep.subr.bf16.mxu0 0
    %183 = vmatpush2.bf16.msra.mxu0 0
    %184 = vmatprep.subr.bf16.mxu0 0
    %185 = vmatpush2.bf16.msra.mxu0 0
    %186 = vmatprep.subr.bf16.mxu0 0
    %187 = vmatpush2.bf16.msra.mxu0 0
    %188 = vmatprep.subr.bf16.mxu0 0
    %189 = vmatpush2.bf16.msra.mxu0 0
    %190 = vmatprep.subr.bf16.mxu0 0
    %191 = vmatpush2.bf16.msra.mxu0 0
    %192 = vmatprep.subr.bf16.mxu0 0
    %193 = vmatpush2.bf16.msra.mxu0 0
    %194 = vmatprep.subr.bf16.mxu0 0
    %195 = vmatpush2.bf16.msra.mxu0 0
    %196 = vmatprep.subr.bf16.mxu0 0
    %197 = vmatpush2.bf16.msra.mxu0 0
    %198 = vmatprep.mubr.bf16.mxu0 0
    %199 = vmatmul.mubr.bf16.gmra.mxu0 %v160
    %v200 = vpop.f32.mrf.mxu0
    %v201 = vadd.f32 %v151, %v200
    %v202 = vpop.f32.mrf.mxu0
    %v203 = vpop.f32.mrf.mxu0
    %v204 = vpop.f32.mrf.mxu0
    %205 = vdwg.mxu0
    %vm206 = vcmask 31744
    %v207 = vsel %vm206, %v141, 0
    %vm209 = vcmask 1041408
    %v211 = vsel %vm209, %v142, 0
    %213 = vmatprep.subr.bf16.mxu0 0
    %214 = vmatpush1.bf16.msra.mxu0 0
    %215 = vmatprep.subr.bf16.mxu0 0
    %216 = vmatpush1.bf16.msra.mxu0 0
    %217 = vmatprep.subr.bf16.mxu0 0
    %218 = vmatpush1.bf16.msra.mxu0 0
    %219 = vmatprep.subr.bf16.mxu0 0
    %220 = vmatpush1.bf16.msra.mxu0 0
    %221 = vmatprep.subr.bf16.mxu0 0
    %222 = vmatpush1.bf16.msra.mxu0 0
    %223 = vmatprep.subr.bf16.mxu0 0
    %224 = vmatpush1.bf16.msra.mxu0 0
    %225 = vmatprep.subr.bf16.mxu0 0
    %226 = vmatpush1.bf16.msra.mxu0 0
    %227 = vmatprep.subr.bf16.mxu0 0
    %228 = vmatpush1.bf16.msra.mxu0 %v211
    %229 = vmatprep.subr.bf16.mxu0 0
    %230 = vmatpush2.bf16.msra.mxu0 0
    %231 = vmatprep.subr.bf16.mxu0 0
    %232 = vmatpush2.bf16.msra.mxu0 0
    %233 = vmatprep.subr.bf16.mxu0 0
    %234 = vmatpush2.bf16.msra.mxu0 0
    %235 = vmatprep.subr.bf16.mxu0 0
    %236 = vmatpush2.bf16.msra.mxu0 0
    %237 = vmatprep.subr.bf16.mxu0 0
    %238 = vmatpush2.bf16.msra.mxu0 0
    %239 = vmatprep.subr.bf16.mxu0 0
    %240 = vmatpush2.bf16.msra.mxu0 0
    %241 = vmatprep.subr.bf16.mxu0 0
    %242 = vmatpush2.bf16.msra.mxu0 0
    %243 = vmatprep.subr.bf16.mxu0 0
    %244 = vmatpush2.bf16.msra.mxu0 0
    %245 = vmatprep.mubr.bf16.mxu0 0
    %246 = vmatmul.mubr.bf16.gmra.mxu0 %v207
    %v247 = vpop.f32.mrf.mxu0
    %v248 = vadd.f32 %v201, %v247
    %v249 = vpop.f32.mrf.mxu0
    %v250 = vpop.f32.mrf.mxu0
    %v251 = vadd.f32 %v201, %v250
    %v252 = vpop.f32.mrf.mxu0
    %253 = vdwg.mxu0
    %v254 = vmax.f32 %v248, 0.0
    %v255 = vmax.f32 %v251, 0.0
    %v256 = vpack.c.bf16 %v255, %v254
    %v257 = vld [vmem:[#allocation4] sm:$0xf]
    %v258 = vld [vmem:[#allocation4 + $0x4] sm:$0xf]
    %v259 = vld [vmem:[#allocation4 + $0x8] sm:$0xf]
    %v260 = vld [vmem:[#allocation4 + $0xc] sm:$0xf]
    %v261 = vld [vmem:[#allocation4 + $0x10] sm:$0xf]
    %v262 = vld [vmem:[#allocation4 + $0x14] sm:$0xf]
    %v263 = vld [vmem:[#allocation4 + $0x18] sm:$0xf]
    %v264 = vld [vmem:[#allocation4 + $0x1c] sm:$0xf]
    %v265 = vld [vmem:[#allocation4 + $0x20] sm:$0xf]
    %v266 = vld [vmem:[#allocation4 + $0x24] sm:$0xf]
    %v267 = vld [vmem:[#allocation4 + $0x28] sm:$0xf]
    %v268 = vld [vmem:[#allocation4 + $0x2c] sm:$0xf]
    %v269 = vld [vmem:[#allocation4 + $0x30] sm:$0xf]
    %v270 = vld [vmem:[#allocation4 + $0x34] sm:$0xf]
    %v271 = vld [vmem:[#allocation4 + $0x38] sm:$0xf]
    %v272 = vld [vmem:[#allocation4 + $0x3c] sm:$0xf]
    %v273 = vld [vmem:[%s8] sm:$0x1]
    %v275 = vlaneseq
    %v276 = vshrl.u32 %v275, 7
    %v277 = vsub.s32 0, %v276
    %v278 = vrot.slane %v273, %v277
    %v296 = vunpack.c.l.b16 %v257
    %v297 = vunpack.c.l.b16 %v258
    %v298 = vunpack.c.l.b16 %v259
    %v299 = vunpack.c.l.b16 %v260
    %v300 = vunpack.c.l.b16 %v261
    %v301 = vunpack.c.l.b16 %v262
    %v302 = vunpack.c.l.b16 %v263
    %v303 = vunpack.c.l.b16 %v264
    %v304 = vunpack.c.l.b16 %v265
    %v305 = vunpack.c.l.b16 %v266
    %v306 = vunpack.c.l.b16 %v267
    %v307 = vunpack.c.l.b16 %v268
    %v308 = vunpack.c.l.b16 %v269
    %v309 = vunpack.c.l.b16 %v270
    %v310 = vunpack.c.l.b16 %v271
    %v311 = vunpack.c.l.b16 %v272
    %v312 = vpack.c.b16 %v297, %v296
    %v313 = vpack.c.b16 %v299, %v298
    %v314 = vpack.c.b16 %v301, %v300
    %v315 = vpack.c.b16 %v303, %v302
    %v316 = vpack.c.b16 %v305, %v304
    %v317 = vpack.c.b16 %v307, %v306
    %v318 = vpack.c.b16 %v309, %v308
    %v319 = vpack.c.b16 %v311, %v310
    %328 = vmatprep.subr.bf16.mxu0 0
    %329 = vmatpush1.bf16.msra.mxu0 %v319
    %330 = vmatprep.subr.bf16.mxu0 0
    %331 = vmatpush1.bf16.msra.mxu0 %v318
    %332 = vmatprep.subr.bf16.mxu0 0
    %333 = vmatpush1.bf16.msra.mxu0 %v317
    %334 = vmatprep.subr.bf16.mxu0 0
    %335 = vmatpush1.bf16.msra.mxu0 %v316
    %336 = vmatprep.subr.bf16.mxu0 0
    %337 = vmatpush1.bf16.msra.mxu0 %v315
    %338 = vmatprep.subr.bf16.mxu0 0
    %339 = vmatpush1.bf16.msra.mxu0 %v314
    %340 = vmatprep.subr.bf16.mxu0 0
    %341 = vmatpush1.bf16.msra.mxu0 %v313
    %342 = vmatprep.subr.bf16.mxu0 0
    %343 = vmatpush1.bf16.msra.mxu0 %v312
    %344 = vmatprep.subr.bf16.mxu0 0
    %345 = vmatpush2.bf16.msra.mxu0 0
    %346 = vmatprep.subr.bf16.mxu0 0
    %347 = vmatpush2.bf16.msra.mxu0 0
    %348 = vmatprep.subr.bf16.mxu0 0
    %349 = vmatpush2.bf16.msra.mxu0 0
    %350 = vmatprep.subr.bf16.mxu0 0
    %351 = vmatpush2.bf16.msra.mxu0 0
    %352 = vmatprep.subr.bf16.mxu0 0
    %353 = vmatpush2.bf16.msra.mxu0 0
    %354 = vmatprep.subr.bf16.mxu0 0
    %355 = vmatpush2.bf16.msra.mxu0 0
    %356 = vmatprep.subr.bf16.mxu0 0
    %357 = vmatpush2.bf16.msra.mxu0 0
    %358 = vmatprep.subr.bf16.mxu0 0
    %359 = vmatpush2.bf16.msra.mxu0 0
    %360 = vmatprep.mubr.bf16.mxu0 0
    %361 = vmatmul.mubr.bf16.gmra.mxu0 %v256
    %v362 = vpop.f32.mrf.mxu0
    %v363 = vadd.f32 %v278, %v362
    %v364 = vpop.f32.mrf.mxu0
    %v365 = vpop.f32.mrf.mxu0
    %v366 = vadd.f32 %v278, %v365
    %v367 = vpop.f32.mrf.mxu0
    %368 = vdwg.mxu0
    %v369 = vmax.f32 %v363, 0.0
    %v370 = vmax.f32 %v366, 0.0
    %v371 = vld [vmem:[%s9] sm:$0x1]
    %v373 = vlaneseq
    %v374 = vshrl.u32 %v373, 7
    %v375 = vsub.s32 0, %v374
    %v376 = vrot.slane %v371, %v375
    %v378 = vmul.f32 %v369, %v376
    %v379 = vmul.f32 %v370, %v376
    %380 = vadd.xlane.f32.xlu0 %v378
    %v381 = vpop.xlane.xlu0 %380
    %382 = vadd.xlane.f32.xlu0 %v379
    %v383 = vpop.xlane.xlu0 %382
    %v384 = vld [vmem:[#allocation3] sm:$0x1]
    %v386 = vlaneseq
    %v387 = vshrl.u32 %v386, 7
    %v388 = vsub.s32 0, %v387
    %v389 = vrot.slane %v384, %v388
    %v391 = vadd.f32 %v381, %v389
    %v392 = vadd.f32 %v383, %v389
    %v393 = vmin.f32 %v391, 0.0
    %v394 = vand.u32 2147483647, %v391
    %v395 = vsub.f32 0.0, %v394
    %v396 = vmul.f32 %v395, 1.442695
    %v397 = vpow.pop %v396
    %v398 = vadd.f32 %v397, 1.0
    %v399 = vlog2.pop %v398
    %v400 = vmul.f32 %v399, 0.6931472
    %v401 = vmul.f32 -0.5, %v397
    %v402 = vadd.f32 %v401, 1.0
    %v403 = vmul.f32 %v402, %v397
    %v404 = vand.u32 2147483647, %v397
    %vm405 = vcmp.lt.f32.partialorder %v404, 0.0004427343
    %v406 = vsel %vm405, %v403, %v400
    %v407 = vsub.f32 %v393, %v406
    %v408 = vsub.f32 0.0, %v392
    %v409 = vmin.f32 %v408, 0.0
    %v410 = vand.u32 2147483647, %v408
    %v411 = vsub.f32 0.0, %v410
    %v412 = vmul.f32 %v411, 1.442695
    %v413 = vpow.pop %v412
    %v414 = vadd.f32 %v413, 1.0
    %v415 = vlog2.pop %v414
    %v416 = vmul.f32 %v415, 0.6931472
    %v417 = vmul.f32 -0.5, %v413
    %v418 = vadd.f32 %v417, 1.0
    %v419 = vmul.f32 %v418, %v413
    %v420 = vand.u32 2147483647, %v413
    %vm421 = vcmp.lt.f32.partialorder %v420, 0.0004427343
    %v422 = vsel %vm421, %v419, %v416
    %v423 = vsub.f32 %v409, %v422
    %v424 = vadd.f32 %v407, %v423
    %v425 = vsub.f32 0.0, %v424
    %v426 = vld [vmem:[#allocation2] sm:$0xff]
    %v427 = vadd.f32 %v426, %v425
    %vm428 = vcmask 7168
    %429 = vst.msk [vmem:[#allocation2] sm:$0xff] %vm428, %v427
    // Predicated region
    $region54: #{tpu_custom_call.1} parent=1 // pred_check
      %p430 = pneg %p124
    $region55: #{tpu_custom_call.1} parent=1 // pred_check_branch
      %432 = sbr.rel (%p430) target = $region57
    $region56: #{tpu_custom_call.1} parent=1 // pred_region
      %v433 = vld [vmem:[#allocation2] sm:$0xff]
      %v434 = vsel %vm428, %v433, 0.0
      %435 = vadd.xlane.f32.xlu0 %v434
      %v436 = vpop.xlane.xlu0 %435
      %v437 = vrot.slane %v436, 4
      %v438 = vadd.f32 %v436, %v437
      %v439 = vrot.slane %v438, 2
      %v440 = vadd.f32 %v438, %v439
      %v441 = vrot.slane %v440, 1
      %v442 = vadd.f32 %v440, %v441
      %s443 = vtos %v442
      %v444 = vstv %s443
      %445 = vst [vmem:[#allocation7] sm:$0xff] %v444
    $region57: #{tpu_custom_call.1} parent=1 // pred_fallthru
      _
    // Predicated region
    $region58: #{tpu_custom_call.1} parent=1 // pred_check
      _
    $region59: #{tpu_custom_call.1} parent=1 // pred_check_branch
      %447 = sbr.rel (0) target = $region61
    $region60: #{tpu_custom_call.1} parent=1 // pred_region
      %s449 = ssub.s32 128, 128
      %450 = vsyncadd [#allocation6], %s449
      %s452 = sshll.u32 [#allocation7], 4
      %s453 = int_to_ptr.vmem [resolvable:$true] %s452
      %455 = dma.vmem_to_hbm [thread:$0]  %s453, 128, %s11, [#allocation6]
    $region61: #{tpu_custom_call.1} parent=1 // pred_fallthru
      _
    // Predicated region
    $region62: #{tpu_custom_call.1} parent=1 // pred_check
      _
    $region63: #{tpu_custom_call.1} parent=1 // pred_check_branch
      %457 = sbr.rel (0) target = $region65
    $region64: #{tpu_custom_call.1} parent=1 // pred_region
      %458 = dma.done [#allocation6], 128
    $region65: #{tpu_custom_call.1} parent=1 // pred_fallthru
      _
    %459 = vsyncpa [#allocation5], 1
    %460 = vsyncpa [#allocation6], 1

</llo_original>
